<compile_context>
chip_gen: v6e
topology: v6e:2x2x1
jax: 0.10.0
libtpu: 0.0.40
codegen_flags: <defaults>
</compile_context>

<pallas_src>
import jax
import jax.numpy as jnp
from jax.experimental import pallas as pl
from jax.experimental.pallas import tpu as pltpu

_LANES = 128
_SUBLANES = 8


# --------------------------------------------------------------------------- kernels
def _ordinal_kernel(x_ref, w_ref, b_ref, o_ref):
    """Single-K-block path: logits = x @ W (f32 MXU accum), bias + sigmoid, store."""
    logits = jnp.dot(x_ref[...], w_ref[...], preferred_element_type=jnp.float32)
    logits = logits + b_ref[...]
    o_ref[...] = jax.nn.sigmoid(logits).astype(o_ref.dtype)


def _ordinal_kernel_ktiled(x_ref, w_ref, b_ref, o_ref, acc_ref):
    """K-tiled path for large D: f32 accumulator, bias + sigmoid on the last K step."""
    k = pl.program_id(1)

    @pl.when(k == 0)
    def _():
        acc_ref[...] = jnp.zeros_like(acc_ref)

    acc_ref[...] += jnp.dot(x_ref[...], w_ref[...],
                            preferred_element_type=jnp.float32)

    @pl.when(k == pl.num_programs(1) - 1)
    def _():
        o_ref[...] = jax.nn.sigmoid(acc_ref[...] + b_ref[...]).astype(o_ref.dtype)


# ------------------------------------------------------------------- parameter prep
def prepare_params(weight, bias, *, use_bf16_matmul=False):
    """One-time parameter prep (call at load time, not per forward).

    * Transposes the PyTorch (n_out, D) weight to the canonical (D, n_out) layout so
      the kernel never re-layouts the resident tile.
    * n_out < 128: no lane padding (direct (B, n_out) output, no post-call slice).
      n_out >= 128: pad to a multiple of 128 for lane-dense stores.
    * Optional one-time bf16 cast of the weight (bias stays f32, added post-accum).
    """
    n_out, _ = weight.shape
    n_pad = int(pl.cdiv(n_out, _LANES)) * _LANES if n_out >= _LANES else n_out
    w_t = jnp.asarray(weight, jnp.float32).T                # (D, n_out)
    b = jnp.asarray(bias, jnp.float32).reshape(1, n_out)
    if n_pad != n_out:
        w_t = jnp.pad(w_t, ((0, 0), (0, n_pad - n_out)))
        b = jnp.pad(b, ((0, 0), (0, n_pad - n_out)))
    if use_bf16_matmul:
        w_t = w_t.astype(jnp.bfloat16)
    return w_t, b, n_out


# ----------------------------------------------------------------------- tile sizing
def _vmem_budget_bytes():
    """Generation-aware VMEM budget + matching Mosaic scoped-VMEM limit."""
    try:
        cap = int(pltpu.get_tpu_info().vmem_capacity_bytes)
    except Exception:                                   # conservative: assume v7x 64 MiB
        cap = 64 * 1024 * 1024
    budget = min(int(cap * 0.6), 64 * 1024 * 1024)      # ~38 MiB on v7x, 64 MiB v5e/v6e
    limit = int(min(budget + (8 << 20), cap - (4 << 20)))
    return budget, limit


def _pick_k_tile(d, n_block, w_itemsize, budget, k_tile=None):
    """Contraction tile.  Full D unless the (double-buffered) weight would eat too much
    VMEM; K tiles must be multiples of 128 that divide D exactly (ragged K blocks would
    feed unspecified pad values into the accumulation)."""
    if k_tile is not None:
        if k_tile < d and k_tile % _LANES == 0 and d % k_tile == 0:
            return int(k_tile)
        return int(d)
    weight_cap = budget // 4                            # keep most of VMEM for x/out tiles
    if d < 2 * _LANES or 2 * d * n_block * w_itemsize <= weight_cap:
        return int(d)
    target = max(_LANES, weight_cap // (2 * n_block * w_itemsize))
    target = (min(target, d) // _LANES) * _LANES
    for tk in range(int(target), _LANES - 1, -_LANES):
        if d % tk == 0:
            return int(tk)
    return int(d)


def _pick_batch_tile(batch, k_block, n_block, x_itemsize, w_itemsize, budget, *, k_tiled):
    """Largest batch tile (multiple of 8, <= 1024 rows) fitting the VMEM budget, counting
    double-buffered x/out tiles, worst-case double-buffered weight, and the f32
    accumulator when K-tiling.  Large batches are split into >= 2 tiles so both v7x
    TensorCores get work (harmless ~0.35 us extra per step on single-TC chips)."""
    resident = 2 * k_block * n_block * w_itemsize + 2 * n_block * 4
    avail = max(budget - resident, 1 << 20)
    per_row = 2 * k_block * x_itemsize + 2 * n_block * 4
    if k_tiled:
        per_row += n_block * 4                           # accumulator scratch rows
    tb = min(avail // per_row, 1024)
    tb = max(_SUBLANES, (tb // _SUBLANES) * _SUBLANES)
    if batch <= tb:
        if batch >= 256:                                 # big enough to be worth splitting
            half = -(-batch // 2)
            half = -(-half // _SUBLANES) * _SUBLANES
            return int(min(half, tb))
        return int(batch)                                # full-array block
    return int(tb)


# ------------------------------------------------------------------------ pallas call
def _build_call(batch, d, n_block, tb, tk, x_dtype, w_dtype, vmem_limit,
                single_buffer_resident):
    resident_kwargs = {}
    if single_buffer_resident:
        # Constant-index_map blocks need only a single buffer.
        resident_kwargs = dict(pipeline_mode=pl.Buffered(1))

    if tk >= d:
        grid = (pl.cdiv(batch, tb),)
        in_specs = [
            pl.BlockSpec((tb, d), lambda i: (i, 0)),                            # x
            pl.BlockSpec((d, n_block), lambda i: (0, 0), **resident_kwargs),    # weight
            pl.BlockSpec((1, n_block), lambda i: (0, 0), **resident_kwargs),    # bias
        ]
        out_specs = pl.BlockSpec((tb, n_block), lambda i: (i, 0))
        scratch_shapes = ()
        kernel = _ordinal_kernel
        semantics = ("parallel",)
    else:
        grid = (pl.cdiv(batch, tb), d // tk)
        in_specs = [
            pl.BlockSpec((tb, tk), lambda i, k: (i, k)),                        # x
            pl.BlockSpec((tk, n_block), lambda i, k: (k, 0)),                   # weight
            pl.BlockSpec((1, n_block), lambda i, k: (0, 0), **resident_kwargs), # bias
        ]
        out_specs = pl.BlockSpec((tb, n_block), lambda i, k: (i, 0))
        scratch_shapes = (pltpu.VMEM((tb, n_block), jnp.float32),)
        kernel = _ordinal_kernel_ktiled
        semantics = ("parallel", "arbitrary")

    x_bytes = batch * d * jnp.dtype(x_dtype).itemsize
    w_bytes = d * n_block * jnp.dtype(w_dtype).itemsize
    return pl.pallas_call(
        kernel,
        out_shape=jax.ShapeDtypeStruct((batch, n_block), jnp.float32),
        grid_spec=pltpu.PrefetchScalarGridSpec(
            num_scalar_prefetch=0,
            grid=grid,
            in_specs=in_specs,
            out_specs=out_specs,
            scratch_shapes=scratch_shapes,
        ),
        compiler_params=pltpu.CompilerParams(
            dimension_semantics=semantics,
            vmem_limit_bytes=int(vmem_limit),
        ),
        cost_estimate=pl.CostEstimate(
            flops=2 * batch * d * n_block,
            transcendentals=batch * n_block,
            bytes_accessed=x_bytes + w_bytes + 4 * (n_block + batch * n_block),
        ),
    )


def ordinal_classifier_forward(x, w_t, b_2d, n_out, *, batch_tile=None, k_tile=None):
    """sigmoid(x @ W + b) with (w_t, b_2d, n_out) from prepare_params.

    x: (B, D).  Returns (B, n_out) float32 probabilities (matches PyTorch forward).
    """
    batch, d = x.shape
    dw, n_block = w_t.shape
    assert dw == d, f"feature mismatch: x has {d}, weight has {dw}"
    if w_t.dtype == jnp.bfloat16 and x.dtype != jnp.bfloat16:
        x = x.astype(jnp.bfloat16)            # one cast in the wrapper, not per tile

    budget, vmem_limit = _vmem_budget_bytes()
    w_itemsize = jnp.dtype(w_t.dtype).itemsize
    x_itemsize = jnp.dtype(x.dtype).itemsize
    tk = _pick_k_tile(d, n_block, w_itemsize, budget, k_tile)
    k_tiled = tk < d
    tb = batch_tile if batch_tile is not None else _pick_batch_tile(
        batch, tk, n_block, x_itemsize, w_itemsize, budget, k_tiled=k_tiled)

    args = (x, w_t, b_2d)
    try:
        out = _build_call(batch, d, n_block, tb, tk, x.dtype, w_t.dtype,
                          vmem_limit, single_buffer_resident=True)(*args)
    except Exception:
        # pl.Buffered(1) on resident blocks not supported on this jax/Mosaic build ->
        # default double-buffering (the VMEM budget already assumed 2 weight buffers).
        out = _build_call(batch, d, n_block, tb, tk, x.dtype, w_t.dtype,
                          vmem_limit, single_buffer_resident=False)(*args)

    if n_block != n_out:
        out = out[:, :n_out]        # only the wide, lane-padded case pays this slice
    return out


def ordinal_classifier_apply(x, weight, bias, *, use_bf16_matmul=False, **kwargs):
    """Convenience one-shot API taking raw PyTorch-layout parameters."""
    w_t, b_2d, n_out = prepare_params(weight, bias, use_bf16_matmul=use_bf16_matmul)
    return ordinal_classifier_forward(x, w_t, b_2d, n_out, **kwargs)


# ------------------------------------------------------------------------------ main
if __name__ == "__main__":
    key = jax.random.PRNGKey(0)

    def make_case(case_key, batch, input_dim, n_classes):
        n_out = n_classes - 1
        kx, kw, kb = jax.random.split(case_key, 3)
        bound = 1.0 / (input_dim ** 0.5)
        x = jax.random.normal(kx, (batch, input_dim), dtype=jnp.float32)
        weight = jax.random.uniform(kw, (n_out, input_dim), dtype=jnp.float32,
                                    minval=-bound, maxval=bound)
        bias = jax.random.uniform(kb, (n_out,), dtype=jnp.float32,
                                  minval=-bound, maxval=bound)
        return x, weight, bias

    k1, k2, k3 = jax.random.split(key, 3)

    # 1) Module-sized case: input_dim=32, n_classes=5 (-> 4 outputs), batch=8.
    x, weight, bias = make_case(k1, batch=8, input_dim=32, n_classes=5)
    w_t, b_2d, n_out = prepare_params(weight, bias)          # one-time parameter prep
    out = jax.block_until_ready(ordinal_classifier_forward(x, w_t, b_2d, n_out))
    ref = jax.nn.sigmoid(x @ weight.T + bias)
    assert out.shape == (8, 4)
    assert jnp.allclose(out, ref, atol=1e-5, rtol=1e-5)

    # 2) K-tiled accumulator path (force a small K tile to exercise it).
    x, weight, bias = make_case(k2, batch=16, input_dim=256, n_classes=5)
    out = jax.block_until_ready(ordinal_classifier_apply(x, weight, bias, k_tile=128))
    ref = jax.nn.sigmoid(x @ weight.T + bias)
    assert out.shape == (16, 4)
    assert jnp.allclose(out, ref, atol=1e-5, rtol=1e-5)

    # 3) Wide-output path (n_out >= 128 -> lane-padded, dense stores + final slice).
    x, weight, bias = make_case(k3, batch=16, input_dim=32, n_classes=130)
    out = jax.block_until_ready(ordinal_classifier_apply(x, weight, bias))
    ref = jax.nn.sigmoid(x @ weight.T + bias)
    assert out.shape == (16, 129)
    assert jnp.allclose(out, ref, atol=1e-5, rtol=1e-5)

    print("KERNEL_OK")
</pallas_src>

<mosaic_0001>
module attributes {stable_mosaic.version = 11 : i64} {
  func.func @_ordinal_kernel(%arg0: i32, %arg1: memref<8x32xf32, #tpu.memory_space<vmem>>, %arg2: memref<32x4xf32, #tpu.memory_space<vmem>>, %arg3: memref<1x4xf32, #tpu.memory_space<vmem>>, %arg4: memref<8x4xf32, #tpu.memory_space<vmem>>) attributes {dimension_semantics = [#tpu.dimension_semantics<parallel>], iteration_bounds = array<i64: 1>, scalar_prefetch = 0 : i64, scratch_operands = 0 : i64, tpu.core_type = #tpu.core_type<tc>, window_params = [{transform_indices = @transform_0, window_bounds = array<i64: 8, 32>}, {pipeline_mode = #tpu.pipeline_mode<synchronous>, transform_indices = @transform_1, window_bounds = array<i64: 32, 4>}, {pipeline_mode = #tpu.pipeline_mode<synchronous>, transform_indices = @transform_2, window_bounds = array<i64: 1, 4>}, {transform_indices = @transform_3, window_bounds = array<i64: 8, 4>}]} {
    %c0 = arith.constant 0 : index
    %c0_0 = arith.constant 0 : index
    %0 = vector.load %arg1[%c0, %c0_0] : memref<8x32xf32, #tpu.memory_space<vmem>>, vector<8x32xf32>
    %c0_1 = arith.constant 0 : index
    %c0_2 = arith.constant 0 : index
    %1 = vector.load %arg2[%c0_1, %c0_2] : memref<32x4xf32, #tpu.memory_space<vmem>>, vector<32x4xf32>
    %cst = arith.constant dense<0.000000e+00> : vector<8x4xf32>
    %2 = tpu.matmul %0, %1, %cst {dimension_numbers = #tpu.dot_dimension_numbers<[1], [0], [0], [1], [0, 0, 1, 1], [], []>} : vector<8x32xf32>, vector<32x4xf32>, vector<8x4xf32> -> vector<8x4xf32>
    %c0_3 = arith.constant 0 : index
    %c0_4 = arith.constant 0 : index
    %3 = vector.load %arg3[%c0_3, %c0_4] : memref<1x4xf32, #tpu.memory_space<vmem>>, vector<1x4xf32>
    %4 = vector.broadcast %3 : vector<1x4xf32> to vector<8x4xf32>
    %5 = arith.addf %2, %4 : vector<8x4xf32>
    %6 = arith.negf %5 : vector<8x4xf32>
    %7 = math.exp %6 : vector<8x4xf32>
    %cst_5 = arith.constant 1.000000e+00 : f32
    %8 = vector.broadcast %cst_5 : f32 to vector<8x4xf32>
    %9 = arith.addf %8, %7 : vector<8x4xf32>
    %10 = arith.divf %8, %9 : vector<8x4xf32>
    %c0_6 = arith.constant 0 : index
    %c0_7 = arith.constant 0 : index
    %11 = vector.load %arg4[%c0_6, %c0_7] : memref<8x4xf32, #tpu.memory_space<vmem>>, vector<8x4xf32>
    tpu.vector_store %arg4[%c0_6, %c0_7], %10 {strides = array<i32>} : memref<8x4xf32, #tpu.memory_space<vmem>>, vector<8x4xf32>,
    return
  }
  func.func @transform_0(%arg0: i32) -> (i32, i32) {
    %c0_i32 = arith.constant 0 : i32
    %c0_i32_0 = arith.constant 0 : i32
    return %arg0, %c0_i32 : i32, i32
  }
  func.func @transform_1(%arg0: i32) -> (i32, i32) {
    %c0_i32 = arith.constant 0 : i32
    %c0_i32_0 = arith.constant 0 : i32
    %c0_i32_1 = arith.constant 0 : i32
    return %c0_i32, %c0_i32_0 : i32, i32
  }
  func.func @transform_2(%arg0: i32) -> (i32, i32) {
    %c0_i32 = arith.constant 0 : i32
    %c0_i32_0 = arith.constant 0 : i32
    %c0_i32_1 = arith.constant 0 : i32
    return %c0_i32, %c0_i32_0 : i32, i32
  }
  func.func @transform_3(%arg0: i32) -> (i32, i32) {
    %c0_i32 = arith.constant 0 : i32
    %c0_i32_0 = arith.constant 0 : i32
    return %arg0, %c0_i32 : i32, i32
  }
}

module attributes {stable_mosaic.version = 11 : i64} {
  func.func @_ordinal_kernel(%arg0: i32, %arg1: memref<8x32xf32, #tpu.memory_space<vmem>>, %arg2: memref<32x4xf32, #tpu.memory_space<vmem>>, %arg3: memref<1x4xf32, #tpu.memory_space<vmem>>, %arg4: memref<8x4xf32, #tpu.memory_space<vmem>>) attributes {dimension_semantics = [#tpu.dimension_semantics<parallel>], iteration_bounds = array<i64: 1>, scalar_prefetch = 0 : i64, scratch_operands = 0 : i64, tpu.core_type = #tpu.core_type<tc>, window_params = [{transform_indices = @transform_0, window_bounds = array<i64: 8, 32>}, {pipeline_mode = #tpu.pipeline_mode<synchronous>, transform_indices = @transform_1, window_bounds = array<i64: 32, 4>}, {pipeline_mode = #tpu.pipeline_mode<synchronous>, transform_indices = @transform_2, window_bounds = array<i64: 1, 4>}, {transform_indices = @transform_3, window_bounds = array<i64: 8, 4>}]} {
    %c0 = arith.constant 0 : index
    %c0_0 = arith.constant 0 : index
    %0 = vector.load %arg1[%c0, %c0_0] : memref<8x32xf32, #tpu.memory_space<vmem>>, vector<8x32xf32>
    %c0_1 = arith.constant 0 : index
    %c0_2 = arith.constant 0 : index
    %1 = vector.load %arg2[%c0_1, %c0_2] : memref<32x4xf32, #tpu.memory_space<vmem>>, vector<32x4xf32>
    %cst = arith.constant dense<0.000000e+00> : vector<8x4xf32>
    %2 = tpu.matmul %0, %1, %cst {dimension_numbers = #tpu.dot_dimension_numbers<[1], [0], [0], [1], [0, 0, 1, 1], [], []>} : vector<8x32xf32>, vector<32x4xf32>, vector<8x4xf32> -> vector<8x4xf32>
    %c0_3 = arith.constant 0 : index
    %c0_4 = arith.constant 0 : index
    %3 = vector.load %arg3[%c0_3, %c0_4] : memref<1x4xf32, #tpu.memory_space<vmem>>, vector<1x4xf32>
    %4 = vector.broadcast %3 : vector<1x4xf32> to vector<8x4xf32>
    %5 = arith.addf %2, %4 : vector<8x4xf32>
    %6 = arith.negf %5 : vector<8x4xf32>
    %7 = math.exp %6 : vector<8x4xf32>
    %cst_5 = arith.constant 1.000000e+00 : f32
    %8 = vector.broadcast %cst_5 : f32 to vector<8x4xf32>
    %9 = arith.addf %8, %7 : vector<8x4xf32>
    %10 = arith.divf %8, %9 : vector<8x4xf32>
    %c0_6 = arith.constant 0 : index
    %c0_7 = arith.constant 0 : index
    %11 = vector.load %arg4[%c0_6, %c0_7] : memref<8x4xf32, #tpu.memory_space<vmem>>, vector<8x4xf32>
    tpu.vector_store %arg4[%c0_6, %c0_7], %10 {strides = array<i32>} : memref<8x4xf32, #tpu.memory_space<vmem>>, vector<8x4xf32>,
    return
  }
  func.func @transform_0(%arg0: i32) -> (i32, i32) {
    %c0_i32 = arith.constant 0 : i32
    %c0_i32_0 = arith.constant 0 : i32
    return %arg0, %c0_i32 : i32, i32
  }
  func.func @transform_1(%arg0: i32) -> (i32, i32) {
    %c0_i32 = arith.constant 0 : i32
    %c0_i32_0 = arith.constant 0 : i32
    %c0_i32_1 = arith.constant 0 : i32
    return %c0_i32, %c0_i32_0 : i32, i32
  }
  func.func @transform_2(%arg0: i32) -> (i32, i32) {
    %c0_i32 = arith.constant 0 : i32
    %c0_i32_0 = arith.constant 0 : i32
    %c0_i32_1 = arith.constant 0 : i32
    return %c0_i32, %c0_i32_0 : i32, i32
  }
  func.func @transform_3(%arg0: i32) -> (i32, i32) {
    %c0_i32 = arith.constant 0 : i32
    %c0_i32_0 = arith.constant 0 : i32
    return %arg0, %c0_i32 : i32, i32
  }
}

</mosaic_0001>

<llo_original>
// kernel: tpu_custom_call.1
$region0: #{tpu_custom_call.1}
  #allocation0 [shape = 'u32[]', space=smem, size = 0x4, offset = 0x4, fixed_abs, tag = 'smem constant byte address 0x4 - core index']
  #allocation1 [shape = 'u32[144,128]{1,0:T(1,128)}', space=vmem, size = 0x12000, scoped, tag = 'internal scratch']
  %s0 = inlined_call_operand.vmem [shape: f32[8,32], index: 0, kind: input, shape index: {}]
  %s1 = inlined_call_operand.vmem [shape: f32[32,4], index: 1, kind: input, shape index: {}]
  %s2 = inlined_call_operand.vmem [shape: f32[1,4], index: 2, kind: input, shape index: {}]
  %s3 = inlined_call_operand.vmem [shape: f32[8,4], index: 3, kind: output, shape index: {}]
  %s4 = sld [smem:[#allocation0]]
  $region22: #{tpu_custom_call.1} parent=0
    _
  %s6 = ssub.s32 1, %s4
  %s7 = scalar_select 0, %s6, %s4
  // Predicated region
  $region2: #{tpu_custom_call.1} parent=0 // pred_check
    _
  $region3: #{tpu_custom_call.1} parent=0 // pred_check_branch
    %9 = sbr.rel (0) target = $region5
  $region4: #{tpu_custom_call.1} parent=0 // pred_region
    _
  $region5: #{tpu_custom_call.1} parent=0 // pred_fallthru
    _
  // Predicated region
  $region6: #{tpu_custom_call.1} parent=0 // pred_check
    _
  $region7: #{tpu_custom_call.1} parent=0 // pred_check_branch
    %11 = sbr.rel (0) target = $region9
  $region8: #{tpu_custom_call.1} parent=0 // pred_region
    _
  $region9: #{tpu_custom_call.1} parent=0 // pred_fallthru
    _
  // Predicated region
  $region10: #{tpu_custom_call.1} parent=0 // pred_check
    _
  $region11: #{tpu_custom_call.1} parent=0 // pred_check_branch
    %13 = sbr.rel (0) target = $region13
  $region12: #{tpu_custom_call.1} parent=0 // pred_region
    _
  $region13: #{tpu_custom_call.1} parent=0 // pred_fallthru
    _
  %v14 = vld [vmem:[%s0] sm:$0xff]
  %v15 = vld [vmem:[%s1] sm:$0xff]
  %v16 = vld [vmem:[%s1 + $0x8] sm:$0xff]
  %v17 = vld [vmem:[%s1 + $0x10] sm:$0xff]
  %v18 = vld [vmem:[%s1 + $0x18] sm:$0xff]
  %v19 = vld [vmem:[%s2] sm:$0x1]
  %v21 = vlaneseq
  %v22 = vshrl.u32 %v21, 7
  %v23 = vsub.s32 0, %v22
  %v24 = vrot.slane %v19, %v23
  %vm26 = vcmask 261120
  %v28 = vsel %vm26, %v14, 0
  %30 = vmatprep.subr.mxu0 0.0
  %31 = vmatpush1.msra.mxu0 0.0
  %32 = vmatprep.subr.mxu0 0.0
  %33 = vmatpush1.msra.mxu0 0.0
  %34 = vmatprep.subr.mxu0 0.0
  %35 = vmatpush1.msra.mxu0 0.0
  %36 = vmatprep.subr.mxu0 0.0
  %37 = vmatpush1.msra.mxu0 0.0
  %38 = vmatprep.subr.mxu0 0.0
  %39 = vmatpush1.msra.mxu0 0.0
  %40 = vmatprep.subr.mxu0 0.0
  %41 = vmatpush1.msra.mxu0 0.0
  %42 = vmatprep.subr.mxu0 0.0
  %43 = vmatpush1.msra.mxu0 0.0
  %44 = vmatprep.subr.mxu0 0.0
  %45 = vmatpush1.msra.mxu0 0.0
  %46 = vmatprep.subr.mxu0 0.0
  %47 = vmatpush1.msra.mxu0 0.0
  %48 = vmatprep.subr.mxu0 0.0
  %49 = vmatpush1.msra.mxu0 0.0
  %50 = vmatprep.subr.mxu0 0.0
  %51 = vmatpush1.msra.mxu0 0.0
  %52 = vmatprep.subr.mxu0 0.0
  %53 = vmatpush1.msra.mxu0 0.0
  %54 = vmatprep.subr.mxu0 0.0
  %55 = vmatpush1.msra.mxu0 %v18
  %56 = vmatprep.subr.mxu0 0.0
  %57 = vmatpush1.msra.mxu0 %v17
  %58 = vmatprep.subr.mxu0 0.0
  %59 = vmatpush1.msra.mxu0 %v16
  %60 = vmatprep.subr.mxu0 0.0
  %61 = vmatpush1.msra.mxu0 %v15
  %62 = vmatprep.subr.mxu0 0.0
  %63 = vmatpush2.msra.mxu0 0.0
  %64 = vmatprep.subr.mxu0 0.0
  %65 = vmatpush2.msra.mxu0 0.0
  %66 = vmatprep.subr.mxu0 0.0
  %67 = vmatpush2.msra.mxu0 0.0
  %68 = vmatprep.subr.mxu0 0.0
  %69 = vmatpush2.msra.mxu0 0.0
  %70 = vmatprep.subr.mxu0 0.0
  %71 = vmatpush2.msra.mxu0 0.0
  %72 = vmatprep.subr.mxu0 0.0
  %73 = vmatpush2.msra.mxu0 0.0
  %74 = vmatprep.subr.mxu0 0.0
  %75 = vmatpush2.msra.mxu0 0.0
  %76 = vmatprep.subr.mxu0 0.0
  %77 = vmatpush2.msra.mxu0 0.0
  %78 = vmatprep.subr.mxu0 0.0
  %79 = vmatpush2.msra.mxu0 0.0
  %80 = vmatprep.subr.mxu0 0.0
  %81 = vmatpush2.msra.mxu0 0.0
  %82 = vmatprep.subr.mxu0 0.0
  %83 = vmatpush2.msra.mxu0 0.0
  %84 = vmatprep.subr.mxu0 0.0
  %85 = vmatpush2.msra.mxu0 0.0
  %86 = vmatprep.subr.mxu0 0.0
  %87 = vmatpush2.msra.mxu0 0.0
  %88 = vmatprep.subr.mxu0 0.0
  %89 = vmatpush2.msra.mxu0 0.0
  %90 = vmatprep.subr.mxu0 0.0
  %91 = vmatpush2.msra.mxu0 0.0
  %92 = vmatprep.subr.mxu0 0.0
  %93 = vmatpush2.msra.mxu0 0.0
  %94 = vmatprep.mubr.f32.mxu0 0.0
  %95 = vmatmul.mubr.f32.gmra.mxu0 %v28
  %v96 = vpop.f32.mrf.mxu0
  %v97 = vadd.f32 %v24, %v96
  %v98 = vpop.f32.mrf.mxu0
  %99 = vdwg.mxu0
  %v100 = vxor.u32 %v97, 2147483648
  %v101 = vmul.f32 %v100, 1.442695
  %v102 = vpow.pop %v101
  %v103 = vadd.f32 %v102, 1.0
  %v104 = vrcp.pop %v103
  %v105 = vmul.f32 1.0, %v104
  %vm106 = vcmask 31744
  %107 = vst.msk [vmem:[%s3] sm:$0xff] %vm106, %v105
  // Predicated region
  $region14: #{tpu_custom_call.1} parent=0 // pred_check
    _
  $region15: #{tpu_custom_call.1} parent=0 // pred_check_branch
    %109 = sbr.rel (0) target = $region17
  $region16: #{tpu_custom_call.1} parent=0 // pred_region
    _
  $region17: #{tpu_custom_call.1} parent=0 // pred_fallthru
    _
  // Predicated region
  $region18: #{tpu_custom_call.1} parent=0 // pred_check
    _
  $region19: #{tpu_custom_call.1} parent=0 // pred_check_branch
    %111 = sbr.rel (0) target = $region21
  $region20: #{tpu_custom_call.1} parent=0 // pred_region
    _
  $region21: #{tpu_custom_call.1} parent=0 // pred_fallthru
    _

// kernel: tpu_custom_call.1
$region0: #{tpu_custom_call.1}
  #allocation0 [shape = 'u32[]', space=smem, size = 0x4, offset = 0x4, fixed_abs, tag = 'smem constant byte address 0x4 - core index']
  #allocation1 [shape = 'u32[144,128]{1,0:T(1,128)}', space=vmem, size = 0x12000, scoped, tag = 'internal scratch']
  %s0 = inlined_call_operand.vmem [shape: f32[8,32], index: 0, kind: input, shape index: {}]
  %s1 = inlined_call_operand.vmem [shape: f32[32,4], index: 1, kind: input, shape index: {}]
  %s2 = inlined_call_operand.vmem [shape: f32[1,4], index: 2, kind: input, shape index: {}]
  %s3 = inlined_call_operand.vmem [shape: f32[8,4], index: 3, kind: output, shape index: {}]
  %s4 = sld [smem:[#allocation0]]
  $region22: #{tpu_custom_call.1} parent=0
    _
  %s6 = ssub.s32 1, %s4
  %s7 = scalar_select 0, %s6, %s4
  // Predicated region
  $region2: #{tpu_custom_call.1} parent=0 // pred_check
    _
  $region3: #{tpu_custom_call.1} parent=0 // pred_check_branch
    %9 = sbr.rel (0) target = $region5
  $region4: #{tpu_custom_call.1} parent=0 // pred_region
    _
  $region5: #{tpu_custom_call.1} parent=0 // pred_fallthru
    _
  // Predicated region
  $region6: #{tpu_custom_call.1} parent=0 // pred_check
    _
  $region7: #{tpu_custom_call.1} parent=0 // pred_check_branch
    %11 = sbr.rel (0) target = $region9
  $region8: #{tpu_custom_call.1} parent=0 // pred_region
    _
  $region9: #{tpu_custom_call.1} parent=0 // pred_fallthru
    _
  // Predicated region
  $region10: #{tpu_custom_call.1} parent=0 // pred_check
    _
  $region11: #{tpu_custom_call.1} parent=0 // pred_check_branch
    %13 = sbr.rel (0) target = $region13
  $region12: #{tpu_custom_call.1} parent=0 // pred_region
    _
  $region13: #{tpu_custom_call.1} parent=0 // pred_fallthru
    _
  %v14 = vld [vmem:[%s0] sm:$0xff]
  %v15 = vld [vmem:[%s1] sm:$0xff]
  %v16 = vld [vmem:[%s1 + $0x8] sm:$0xff]
  %v17 = vld [vmem:[%s1 + $0x10] sm:$0xff]
  %v18 = vld [vmem:[%s1 + $0x18] sm:$0xff]
  %v19 = vld [vmem:[%s2] sm:$0x1]
  %v21 = vlaneseq
  %v22 = vshrl.u32 %v21, 7
  %v23 = vsub.s32 0, %v22
  %v24 = vrot.slane %v19, %v23
  %vm26 = vcmask 261120
  %v28 = vsel %vm26, %v14, 0
  %30 = vmatprep.subr.mxu0 0.0
  %31 = vmatpush1.msra.mxu0 0.0
  %32 = vmatprep.subr.mxu0 0.0
  %33 = vmatpush1.msra.mxu0 0.0
  %34 = vmatprep.subr.mxu0 0.0
  %35 = vmatpush1.msra.mxu0 0.0
  %36 = vmatprep.subr.mxu0 0.0
  %37 = vmatpush1.msra.mxu0 0.0
  %38 = vmatprep.subr.mxu0 0.0
  %39 = vmatpush1.msra.mxu0 0.0
  %40 = vmatprep.subr.mxu0 0.0
  %41 = vmatpush1.msra.mxu0 0.0
  %42 = vmatprep.subr.mxu0 0.0
  %43 = vmatpush1.msra.mxu0 0.0
  %44 = vmatprep.subr.mxu0 0.0
  %45 = vmatpush1.msra.mxu0 0.0
  %46 = vmatprep.subr.mxu0 0.0
  %47 = vmatpush1.msra.mxu0 0.0
  %48 = vmatprep.subr.mxu0 0.0
  %49 = vmatpush1.msra.mxu0 0.0
  %50 = vmatprep.subr.mxu0 0.0
  %51 = vmatpush1.msra.mxu0 0.0
  %52 = vmatprep.subr.mxu0 0.0
  %53 = vmatpush1.msra.mxu0 0.0
  %54 = vmatprep.subr.mxu0 0.0
  %55 = vmatpush1.msra.mxu0 %v18
  %56 = vmatprep.subr.mxu0 0.0
  %57 = vmatpush1.msra.mxu0 %v17
  %58 = vmatprep.subr.mxu0 0.0
  %59 = vmatpush1.msra.mxu0 %v16
  %60 = vmatprep.subr.mxu0 0.0
  %61 = vmatpush1.msra.mxu0 %v15
  %62 = vmatprep.subr.mxu0 0.0
  %63 = vmatpush2.msra.mxu0 0.0
  %64 = vmatprep.subr.mxu0 0.0
  %65 = vmatpush2.msra.mxu0 0.0
  %66 = vmatprep.subr.mxu0 0.0
  %67 = vmatpush2.msra.mxu0 0.0
  %68 = vmatprep.subr.mxu0 0.0
  %69 = vmatpush2.msra.mxu0 0.0
  %70 = vmatprep.subr.mxu0 0.0
  %71 = vmatpush2.msra.mxu0 0.0
  %72 = vmatprep.subr.mxu0 0.0
  %73 = vmatpush2.msra.mxu0 0.0
  %74 = vmatprep.subr.mxu0 0.0
  %75 = vmatpush2.msra.mxu0 0.0
  %76 = vmatprep.subr.mxu0 0.0
  %77 = vmatpush2.msra.mxu0 0.0
  %78 = vmatprep.subr.mxu0 0.0
  %79 = vmatpush2.msra.mxu0 0.0
  %80 = vmatprep.subr.mxu0 0.0
  %81 = vmatpush2.msra.mxu0 0.0
  %82 = vmatprep.subr.mxu0 0.0
  %83 = vmatpush2.msra.mxu0 0.0
  %84 = vmatprep.subr.mxu0 0.0
  %85 = vmatpush2.msra.mxu0 0.0
  %86 = vmatprep.subr.mxu0 0.0
  %87 = vmatpush2.msra.mxu0 0.0
  %88 = vmatprep.subr.mxu0 0.0
  %89 = vmatpush2.msra.mxu0 0.0
  %90 = vmatprep.subr.mxu0 0.0
  %91 = vmatpush2.msra.mxu0 0.0
  %92 = vmatprep.subr.mxu0 0.0
  %93 = vmatpush2.msra.mxu0 0.0
  %94 = vmatprep.mubr.f32.mxu0 0.0
  %95 = vmatmul.mubr.f32.gmra.mxu0 %v28
  %v96 = vpop.f32.mrf.mxu0
  %v97 = vadd.f32 %v24, %v96
  %v98 = vpop.f32.mrf.mxu0
  %99 = vdwg.mxu0
  %v100 = vxor.u32 %v97, 2147483648
  %v101 = vmul.f32 %v100, 1.442695
  %v102 = vpow.pop %v101
  %v103 = vadd.f32 %v102, 1.0
  %v104 = vrcp.pop %v103
  %v105 = vmul.f32 1.0, %v104
  %vm106 = vcmask 31744
  %107 = vst.msk [vmem:[%s3] sm:$0xff] %vm106, %v105
  // Predicated region
  $region14: #{tpu_custom_call.1} parent=0 // pred_check
    _
  $region15: #{tpu_custom_call.1} parent=0 // pred_check_branch
    %109 = sbr.rel (0) target = $region17
  $region16: #{tpu_custom_call.1} parent=0 // pred_region
    _
  $region17: #{tpu_custom_call.1} parent=0 // pred_fallthru
    _
  // Predicated region
  $region18: #{tpu_custom_call.1} parent=0 // pred_check
    _
  $region19: #{tpu_custom_call.1} parent=0 // pred_check_branch
    %111 = sbr.rel (0) target = $region21
  $region20: #{tpu_custom_call.1} parent=0 // pred_region
    _
  $region21: #{tpu_custom_call.1} parent=0 // pred_fallthru
    _

</llo_original>
